<compile_context>
chip_gen: v6e
topology: v6e:2x2x1
jax: 0.10.0
libtpu: 0.0.40
codegen_flags: <defaults>
</compile_context>

<pallas_src>
import functools

import jax
import jax.numpy as jnp
from jax.experimental import pallas as pl
from jax.experimental.pallas import tpu as pltpu


def _bce_with_logits(x, t):
    # Numerically stable per-element BCE-with-logits (reduce=False).
    return jnp.maximum(x, 0.0) - x * t + jnp.log1p(jnp.exp(-jnp.abs(x)))


def _shared_loss_terms(x, t, margin):
    """Dedup'd loss math shared by both kernels (single softplus per element)."""
    pos = (t > margin).astype(jnp.float32)
    neg = (t < -margin).astype(jnp.float32)
    sp = jnp.log1p(jnp.exp(-jnp.abs(x)))          # shared softplus (EUP)
    base = sp - x * t                             # shared by both branches
    loss = pos * (base + jnp.maximum(x, 0.0)) + neg * (base + jnp.maximum(-x, 0.0))
    return loss, pos, neg


def _bce_loss_kernel(x_ref, t_ref, o_ref, *, margin):
    x = x_ref[...].astype(jnp.float32)
    t = t_ref[...].astype(jnp.float32)
    loss, _, _ = _shared_loss_terms(x, t, margin)
    o_ref[...] = loss.astype(o_ref.dtype)


def _bce_loss_reduce_kernel(x_ref, t_ref, sum_ref, cnt_ref, *,
                            margin, rows, n_valid, c_valid, needs_mask):
    @pl.when(pl.program_id(0) == 0)
    def _():
        sum_ref[...] = jnp.zeros_like(sum_ref)
        cnt_ref[...] = jnp.zeros_like(cnt_ref)

    x = x_ref[...].astype(jnp.float32)
    t = t_ref[...].astype(jnp.float32)
    loss, pos, neg = _shared_loss_terms(x, t, margin)
    cnt = pos + neg

    if needs_mask:
        # Exact handling of padded rows/cols for any margin sign.  Pure VPU
        # work, hidden under the HBM DMA of this memory-bound kernel.
        row0 = pl.program_id(0) * rows
        rr = row0 + jax.lax.broadcasted_iota(jnp.int32, x.shape, 0)
        cc = jax.lax.broadcasted_iota(jnp.int32, x.shape, 1)
        valid = ((rr < n_valid) & (cc < c_valid)).astype(jnp.float32)
        loss = loss * valid
        cnt = cnt * valid

    # Masks are disjoint; loss is zero outside the mask, so the full sum
    # equals the masked sum and sum(pos+neg) is the masked element count.
    sum_ref[...] += jnp.sum(loss, axis=(0, 1), keepdims=True)
    cnt_ref[...] += jnp.sum(cnt, axis=(0, 1), keepdims=True)


def _pick_row_tile(n_rows, c_pad, itemsize, vmem_budget_bytes=8 << 20):
    """Largest 8-aligned row tile whose double-buffered traffic fits the budget."""
    bytes_per_row = 3 * 2 * c_pad * itemsize      # 2 inputs + 1 output, 2 buffers
    rows = max(8, (vmem_budget_bytes // bytes_per_row) // 8 * 8)
    n_ceil = ((n_rows + 7) // 8) * 8
    if rows >= n_ceil:
        # Whole problem fits in one tile; for larger problems split in two so
        # both v7x TensorCores get work ("parallel" grid axis).
        rows = n_ceil if n_ceil <= 256 else ((n_ceil // 2 + 7) // 8) * 8
    return rows


def bce_loss(inp, target, *, margin=0.0, reduce=None, size_average=None):
    """Pallas implementation of SSGRL BCELoss.forward."""
    assert inp.shape == target.shape and inp.ndim == 2
    n, c = inp.shape
    out_dtype = inp.dtype
    itemsize = jnp.dtype(inp.dtype).itemsize

    # Lane-dense class axis (multiple of 128); 8-aligned row tiles.
    c_pad = ((c + 127) // 128) * 128
    rows = _pick_row_tile(n, c_pad, itemsize)
    n_pad = pl.cdiv(n, rows) * rows
    padded = (n_pad, c_pad) != (n, c)

    if padded:
        inp_p = jnp.zeros((n_pad, c_pad), inp.dtype).at[:n, :c].set(inp)
        tgt_p = jnp.zeros((n_pad, c_pad), target.dtype).at[:n, :c].set(target)
    else:
        inp_p, tgt_p = inp, target

    grid = (n_pad // rows,)
    in_specs = [
        pl.BlockSpec((rows, c_pad), lambda i: (i, 0)),
        pl.BlockSpec((rows, c_pad), lambda i: (i, 0)),
    ]

    if reduce:
        # Fused masked-sum / masked-count reduction: no (N, C) store, no extra
        # HBM passes over input/target.
        masked_sum, masked_cnt = pl.pallas_call(
            functools.partial(
                _bce_loss_reduce_kernel,
                margin=float(margin), rows=rows,
                n_valid=n, c_valid=c, needs_mask=padded),
            out_shape=(jax.ShapeDtypeStruct((1, 1), jnp.float32),
                       jax.ShapeDtypeStruct((1, 1), jnp.float32)),
            grid_spec=pltpu.PrefetchScalarGridSpec(
                num_scalar_prefetch=0,
                grid=grid,
                in_specs=in_specs,
                out_specs=(pl.BlockSpec((1, 1), lambda i: (0, 0)),
                           pl.BlockSpec((1, 1), lambda i: (0, 0))),
            ),
            compiler_params=pltpu.CompilerParams(
                dimension_semantics=("arbitrary",)),
        )(inp_p, tgt_p)
        s = masked_sum[0, 0]
        cnt = masked_cnt[0, 0]
        if size_average:
            # PyTorch fallback mean(loss) when nothing is masked is 0 because
            # loss is identically 0 there.
            return jnp.where(cnt > 0, s / jnp.maximum(cnt, 1.0),
                             jnp.zeros((), jnp.float32))
        # Fallback sum(loss) when nothing is masked is also 0 == s.
        return s

    loss = pl.pallas_call(
        functools.partial(_bce_loss_kernel, margin=float(margin)),
        out_shape=jax.ShapeDtypeStruct((n_pad, c_pad), out_dtype),
        grid_spec=pltpu.PrefetchScalarGridSpec(
            num_scalar_prefetch=0,
            grid=grid,
            in_specs=in_specs,
            out_specs=pl.BlockSpec((rows, c_pad), lambda i: (i, 0)),
        ),
        compiler_params=pltpu.CompilerParams(
            dimension_semantics=("parallel",)),
    )(inp_p, tgt_p)

    if padded:
        loss = loss[:n, :c]
    return loss


def _reference(inp, target, margin=0.0):
    pos = (target > margin).astype(jnp.float32)
    neg = (target < -margin).astype(jnp.float32)
    return (pos * _bce_with_logits(inp, target)
            + neg * _bce_with_logits(-inp, -target))


if __name__ == "__main__":
    key = jax.random.PRNGKey(0)
    k1, k2 = jax.random.split(key)

    # Small multi-label problem: 16 samples, 128 classes, targets in {-1,0,+1}.
    N, C = 16, 128
    logits = jax.random.normal(k1, (N, C), dtype=jnp.float32) * 2.0
    target = jax.random.randint(k2, (N, C), -1, 2).astype(jnp.float32)

    # Elementwise path (reduce=None, the module default).
    out = jax.block_until_ready(bce_loss(logits, target))
    ref = _reference(logits, target)
    assert out.shape == (N, C)
    assert out.dtype == logits.dtype
    assert jnp.allclose(out, ref, atol=1e-5, rtol=1e-5)

    # Fused reduction paths (reduce=True, with and without size_average).
    red_sum = jax.block_until_ready(bce_loss(logits, target, reduce=True))
    red_mean = jax.block_until_ready(
        bce_loss(logits, target, reduce=True, size_average=True))
    any_mask = (target > 0.0) | (target < 0.0)
    ref_sum = jnp.sum(jnp.where(any_mask, ref, 0.0))
    ref_mean = ref_sum / jnp.maximum(jnp.sum(any_mask.astype(jnp.float32)), 1.0)
    assert jnp.allclose(red_sum, ref_sum, atol=1e-3, rtol=1e-4)
    assert jnp.allclose(red_mean, ref_mean, atol=1e-5, rtol=1e-4)

    # Non-aligned shape exercises the padding/slicing (and masked-reduce) path.
    N2, C2 = 10, 100
    logits2 = jax.random.normal(k1, (N2, C2), dtype=jnp.float32)
    target2 = jax.random.randint(k2, (N2, C2), -1, 2).astype(jnp.float32)
    out2 = jax.block_until_ready(bce_loss(logits2, target2))
    ref2 = _reference(logits2, target2)
    assert out2.shape == (N2, C2)
    assert jnp.allclose(out2, ref2, atol=1e-5, rtol=1e-5)

    red2 = jax.block_until_ready(
        bce_loss(logits2, target2, reduce=True, size_average=True))
    mask2 = (target2 > 0.0) | (target2 < 0.0)
    ref2_mean = (jnp.sum(jnp.where(mask2, ref2, 0.0))
                 / jnp.maximum(jnp.sum(mask2.astype(jnp.float32)), 1.0))
    assert jnp.allclose(red2, ref2_mean, atol=1e-5, rtol=1e-4)

    print("KERNEL_OK")
</pallas_src>

<mosaic_0001>
module attributes {stable_mosaic.version = 11 : i64} {
  func.func @_bce_loss_kernel(%arg0: i32, %arg1: memref<16x128xf32, #tpu.memory_space<vmem>>, %arg2: memref<16x128xf32, #tpu.memory_space<vmem>>, %arg3: memref<16x128xf32, #tpu.memory_space<vmem>>) attributes {dimension_semantics = [#tpu.dimension_semantics<parallel>], iteration_bounds = array<i64: 1>, scalar_prefetch = 0 : i64, scratch_operands = 0 : i64, tpu.core_type = #tpu.core_type<tc>, window_params = [{transform_indices = @transform_0, window_bounds = array<i64: 16, 128>}, {transform_indices = @transform_1, window_bounds = array<i64: 16, 128>}, {transform_indices = @transform_2, window_bounds = array<i64: 16, 128>}]} {
    %c0 = arith.constant 0 : index
    %c0_0 = arith.constant 0 : index
    %0 = vector.load %arg1[%c0, %c0_0] : memref<16x128xf32, #tpu.memory_space<vmem>>, vector<16x128xf32>
    %c0_1 = arith.constant 0 : index
    %c0_2 = arith.constant 0 : index
    %1 = vector.load %arg2[%c0_1, %c0_2] : memref<16x128xf32, #tpu.memory_space<vmem>>, vector<16x128xf32>
    %cst = arith.constant 0.000000e+00 : f32
    %2 = vector.broadcast %cst : f32 to vector<16x128xf32>
    %3 = arith.cmpf ogt, %1, %2 : vector<16x128xf32>
    %4 = arith.extui %3 : vector<16x128xi1> to vector<16x128xi32>
    %5 = arith.sitofp %4 : vector<16x128xi32> to vector<16x128xf32>
    %cst_3 = arith.constant -0.000000e+00 : f32
    %6 = vector.broadcast %cst_3 : f32 to vector<16x128xf32>
    %7 = arith.cmpf olt, %1, %6 : vector<16x128xf32>
    %8 = arith.extui %7 : vector<16x128xi1> to vector<16x128xi32>
    %9 = arith.sitofp %8 : vector<16x128xi32> to vector<16x128xf32>
    %10 = math.absf %0 : vector<16x128xf32>
    %cst_4 = arith.constant 0.000000e+00 : f32
    %11 = vector.broadcast %cst_4 : f32 to vector<16x128xf32>
    %12 = arith.subf %11, %10 : vector<16x128xf32>
    %13 = math.exp %12 : vector<16x128xf32>
    %14 = math.log1p %13 : vector<16x128xf32>
    %15 = arith.mulf %0, %1 : vector<16x128xf32>
    %16 = arith.subf %14, %15 : vector<16x128xf32>
    %cst_5 = arith.constant 0.000000e+00 : f32
    %17 = vector.broadcast %cst_5 : f32 to vector<16x128xf32>
    %18 = arith.maximumf %0, %17 : vector<16x128xf32>
    %19 = arith.addf %16, %18 : vector<16x128xf32>
    %20 = arith.mulf %5, %19 : vector<16x128xf32>
    %cst_6 = arith.constant 0.000000e+00 : f32
    %21 = vector.broadcast %cst_6 : f32 to vector<16x128xf32>
    %22 = arith.subf %21, %0 : vector<16x128xf32>
    %cst_7 = arith.constant 0.000000e+00 : f32
    %23 = vector.broadcast %cst_7 : f32 to vector<16x128xf32>
    %24 = arith.maximumf %22, %23 : vector<16x128xf32>
    %25 = arith.addf %16, %24 : vector<16x128xf32>
    %26 = arith.mulf %9, %25 : vector<16x128xf32>
    %27 = arith.addf %20, %26 : vector<16x128xf32>
    %c0_8 = arith.constant 0 : index
    %c0_9 = arith.constant 0 : index
    %28 = vector.load %arg3[%c0_8, %c0_9] : memref<16x128xf32, #tpu.memory_space<vmem>>, vector<16x128xf32>
    tpu.vector_store %arg3[%c0_8, %c0_9], %27 {strides = array<i32>} : memref<16x128xf32, #tpu.memory_space<vmem>>, vector<16x128xf32>,
    return
  }
  func.func @transform_0(%arg0: i32) -> (i32, i32) {
    %c0_i32 = arith.constant 0 : i32
    %c0_i32_0 = arith.constant 0 : i32
    return %arg0, %c0_i32 : i32, i32
  }
  func.func @transform_1(%arg0: i32) -> (i32, i32) {
    %c0_i32 = arith.constant 0 : i32
    %c0_i32_0 = arith.constant 0 : i32
    return %arg0, %c0_i32 : i32, i32
  }
  func.func @transform_2(%arg0: i32) -> (i32, i32) {
    %c0_i32 = arith.constant 0 : i32
    %c0_i32_0 = arith.constant 0 : i32
    return %arg0, %c0_i32 : i32, i32
  }
}

</mosaic_0001>

<llo_original>
// kernel: tpu_custom_call.1
$region0: #{tpu_custom_call.1}
  #allocation0 [shape = 'u32[]', space=smem, size = 0x4, offset = 0x4, fixed_abs, tag = 'smem constant byte address 0x4 - core index']
  #allocation1 [shape = 'u32[144,128]{1,0:T(1,128)}', space=vmem, size = 0x12000, scoped, tag = 'internal scratch']
  %s0 = inlined_call_operand.hbm [shape: f32[16,128], index: 0, kind: input, shape index: {}]
  %s1 = inlined_call_operand.hbm [shape: f32[16,128], index: 1, kind: input, shape index: {}]
  %s2 = inlined_call_operand.hbm [shape: f32[16,128], index: 2, kind: output, shape index: {}]
  %s3 = sld [smem:[#allocation0]]
  $region26: #{tpu_custom_call.1} parent=0
    _
  %s5 = ssub.s32 1, %s3
  %s6 = scalar_select 0, %s5, %s3
  $region1: #{tpu_custom_call.1} parent=0
    #allocation2 [shape = 'u8[8192]{0}', space=vmem, size = 0x2000, scoped, tag = 'input window, operand 0, single buffered']
    #allocation3 [shape = 's32[1]{0}', space=sflag, size = 0x4, scoped, tag = 'scoped memory for tpu_custom_call.1']
    #allocation4 [shape = 's32[1]{0}', space=sflag, size = 0x4, scoped, tag = 'scoped memory for tpu_custom_call.1']
    #allocation5 [shape = 'u8[8192]{0}', space=vmem, size = 0x2000, scoped, tag = 'input window, operand 1, single buffered']
    #allocation6 [shape = 's32[1]{0}', space=sflag, size = 0x4, scoped, tag = 'scoped memory for tpu_custom_call.1']
    #allocation7 [shape = 'u8[8192]{0}', space=vmem, size = 0x2000, scoped, tag = 'output window, operand 0, single buffered']
    %7 = vsyncpa [#allocation3], 0
    %8 = vsyncpa [#allocation6], 0
    %9 = vsyncpa [#allocation4], 0
    // Predicated region
    $region2: #{tpu_custom_call.1} parent=1 // pred_check
      _
    $region3: #{tpu_custom_call.1} parent=1 // pred_check_branch
      %11 = sbr.rel (0) target = $region5
    $region4: #{tpu_custom_call.1} parent=1 // pred_region
      %s13 = ssub.s32 256, 256
      %14 = vsyncadd [#allocation3], %s13
      %s15 = sshll.u32 [#allocation2], 4
      %s16 = int_to_ptr.vmem [resolvable:$true] %s15
      %21 = dma.hbm_to_vmem [thread:$0]  %s0, 256, %s16, [#allocation3], 128, 128, 8
    $region5: #{tpu_custom_call.1} parent=1 // pred_fallthru
      _
    // Predicated region
    $region6: #{tpu_custom_call.1} parent=1 // pred_check
      _
    $region7: #{tpu_custom_call.1} parent=1 // pred_check_branch
      %23 = sbr.rel (0) target = $region9
    $region8: #{tpu_custom_call.1} parent=1 // pred_region
      %s25 = ssub.s32 256, 256
      %26 = vsyncadd [#allocation6], %s25
      %s27 = sshll.u32 [#allocation5], 4
      %s28 = int_to_ptr.vmem [resolvable:$true] %s27
      %33 = dma.hbm_to_vmem [thread:$0]  %s1, 256, %s28, [#allocation6], 128, 128, 8
    $region9: #{tpu_custom_call.1} parent=1 // pred_fallthru
      _
    // Predicated region
    $region10: #{tpu_custom_call.1} parent=1 // pred_check
      _
    $region11: #{tpu_custom_call.1} parent=1 // pred_check_branch
      %35 = sbr.rel (0) target = $region13
    $region12: #{tpu_custom_call.1} parent=1 // pred_region
      %36 = dma.done [#allocation3], 256
    $region13: #{tpu_custom_call.1} parent=1 // pred_fallthru
      _
    // Predicated region
    $region14: #{tpu_custom_call.1} parent=1 // pred_check
      _
    $region15: #{tpu_custom_call.1} parent=1 // pred_check_branch
      %38 = sbr.rel (0) target = $region17
    $region16: #{tpu_custom_call.1} parent=1 // pred_region
      %39 = dma.done [#allocation6], 256
    $region17: #{tpu_custom_call.1} parent=1 // pred_fallthru
      _
    %v40 = vld [vmem:[#allocation2] sm:$0xff]
    %v41 = vld [vmem:[#allocation2 + $0x8] sm:$0xff]
    %v42 = vld [vmem:[#allocation5] sm:$0xff]
    %v43 = vld [vmem:[#allocation5 + $0x8] sm:$0xff]
    %vm44 = vcmp.gt.f32.partialorder %v42, 0.0
    %vm45 = vcmp.gt.f32.partialorder %v43, 0.0
    %v46 = vsel %vm44, 1, 0
    %v47 = vsel %vm45, 1, 0
    %v48 = vcvt.s32.f32 %v46
    %v49 = vcvt.s32.f32 %v47
    %vm50 = vcmp.lt.f32.partialorder %v42, -0.0
    %vm51 = vcmp.lt.f32.partialorder %v43, -0.0
    %v52 = vsel %vm50, 1, 0
    %v53 = vsel %vm51, 1, 0
    %v54 = vcvt.s32.f32 %v52
    %v55 = vcvt.s32.f32 %v53
    %v56 = vand.u32 2147483647, %v40
    %v57 = vand.u32 2147483647, %v41
    %v58 = vsub.f32 0.0, %v56
    %v59 = vsub.f32 0.0, %v57
    %v60 = vmul.f32 %v58, 1.442695
    %v61 = vpow.pop %v60
    %v62 = vmul.f32 %v59, 1.442695
    %v63 = vpow.pop %v62
    %v64 = vadd.f32 %v61, 1.0
    %v65 = vlog2.pop %v64
    %v66 = vmul.f32 %v65, 0.6931472
    %v67 = vmul.f32 -0.5, %v61
    %v68 = vadd.f32 %v67, 1.0
    %v69 = vmul.f32 %v68, %v61
    %v70 = vand.u32 2147483647, %v61
    %vm71 = vcmp.lt.f32.partialorder %v70, 0.0004427343
    %v72 = vsel %vm71, %v69, %v66
    %v73 = vadd.f32 %v63, 1.0
    %v74 = vlog2.pop %v73
    %v75 = vmul.f32 %v74, 0.6931472
    %v76 = vmul.f32 -0.5, %v63
    %v77 = vadd.f32 %v76, 1.0
    %v78 = vmul.f32 %v77, %v63
    %v79 = vand.u32 2147483647, %v63
    %vm80 = vcmp.lt.f32.partialorder %v79, 0.0004427343
    %v81 = vsel %vm80, %v78, %v75
    %v82 = vmul.f32 %v40, %v42
    %v83 = vmul.f32 %v41, %v43
    %v84 = vsub.f32 %v72, %v82
    %v85 = vsub.f32 %v81, %v83
    %v86 = vmax.f32 %v40, 0.0
    %v87 = vmax.f32 %v41, 0.0
    %v88 = vadd.f32 %v84, %v86
    %v89 = vadd.f32 %v85, %v87
    %v90 = vmul.f32 %v48, %v88
    %v91 = vmul.f32 %v49, %v89
    %v92 = vsub.f32 0.0, %v40
    %v93 = vsub.f32 0.0, %v41
    %v94 = vmax.f32 %v92, 0.0
    %v95 = vmax.f32 %v93, 0.0
    %v96 = vadd.f32 %v84, %v94
    %v97 = vadd.f32 %v85, %v95
    %v98 = vmul.f32 %v54, %v96
    %v99 = vmul.f32 %v55, %v97
    %v100 = vadd.f32 %v90, %v98
    %v101 = vadd.f32 %v91, %v99
    %102 = vst [vmem:[#allocation7] sm:$0xff] %v100
    %103 = vst [vmem:[#allocation7 + $0x8] sm:$0xff] %v101
    // Predicated region
    $region18: #{tpu_custom_call.1} parent=1 // pred_check
      _
    $region19: #{tpu_custom_call.1} parent=1 // pred_check_branch
      %105 = sbr.rel (0) target = $region21
    $region20: #{tpu_custom_call.1} parent=1 // pred_region
      %s107 = ssub.s32 256, 256
      %108 = vsyncadd [#allocation4], %s107
      %s109 = sshll.u32 [#allocation7], 4
      %s110 = int_to_ptr.vmem [resolvable:$true] %s109
      %115 = dma.vmem_to_hbm [thread:$0]  %s110, 256, %s2, [#allocation4], 128, 128, 8
    $region21: #{tpu_custom_call.1} parent=1 // pred_fallthru
      _
    // Predicated region
    $region22: #{tpu_custom_call.1} parent=1 // pred_check
      _
    $region23: #{tpu_custom_call.1} parent=1 // pred_check_branch
      %117 = sbr.rel (0) target = $region25
    $region24: #{tpu_custom_call.1} parent=1 // pred_region
      %118 = dma.done [#allocation4], 256
    $region25: #{tpu_custom_call.1} parent=1 // pred_fallthru
      _
    %119 = vsyncpa [#allocation3], 1
    %120 = vsyncpa [#allocation6], 1
    %121 = vsyncpa [#allocation4], 1

</llo_original>
